<compile_context>
chip_gen: v5e
topology: v5e:2x2
jax: 0.10.0
libtpu: 0.0.40
codegen_flags: <defaults>
</compile_context>

<pallas_src>
import math
import functools

import jax
import jax.numpy as jnp
from jax.experimental import pallas as pl
from jax.experimental.pallas import tpu as pltpu


# ----------------------------------------------------------------------------
# Buffer setup (plain JAX) -- mirrors the PyTorch __init__
# ----------------------------------------------------------------------------
def make_positional_encoding(max_len: int, d_model: int, dtype=jnp.float32):
    position = jnp.arange(max_len, dtype=jnp.float32)[:, None]              # (L, 1)
    div_term1 = jnp.exp(
        jnp.arange(0, d_model, 2, dtype=jnp.float32) * (-math.log(10000.0) / d_model)
    )
    div_term2 = jnp.exp(
        jnp.arange(0, (d_model // 2) * 2, 2, dtype=jnp.float32)
        * (-math.log(10000.0) / d_model)
    )
    pe = jnp.zeros((max_len, d_model), dtype=jnp.float32)
    pe = pe.at[:, 0::2].set(jnp.sin(position * div_term1))
    pe = pe.at[:, 1::2].set(jnp.cos(position * div_term2))
    return pe.astype(dtype)                                                 # (L, D)


# ----------------------------------------------------------------------------
# Kernels.  Eval path: y = x + pe.  Train path: y = dropout(x + pe) with an
# integer-threshold compare on pre-generated uint32 random bits (no float
# conversion, no per-step PRNG re-seed).
# Compute stays in x's dtype (bf16 stays bf16 on v6e/v7x; f32 path unchanged).
# ----------------------------------------------------------------------------
def _pe_add_kernel(x_ref, pe_ref, o_ref):
    # x: (TS, B, D), pe: (TS, 1, D) -> broadcast over batch (sublane dim)
    o_ref[...] = (x_ref[...] + pe_ref[...]).astype(o_ref.dtype)


def _pe_add_dropout_kernel(x_ref, pe_ref, bits_ref, o_ref, *, p):
    x = x_ref[...]                           # (TS, B, D)
    y = x + pe_ref[...]                      # broadcast (TS, 1, D) over batch
    # P(bits < thresh) == p  ->  drop; pure u32 compare, no int->float convert.
    thresh = jnp.uint32(min(int(round(p * (1 << 32))), (1 << 32) - 1))
    keep = bits_ref[...] >= thresh
    scale = jnp.asarray(1.0 / (1.0 - p), dtype=y.dtype)
    o_ref[...] = jnp.where(keep, y * scale, jnp.zeros_like(y)).astype(o_ref.dtype)


def _choose_tile_s(S: int, B: int, D: int, itemsize: int) -> int:
    # ~2 MiB of x per tile; with x/bits/pe inputs + output, each double-buffered,
    # total VMEM stays well under v7x's 64 MiB (and under the raised scoped limit).
    target_bytes = 2 * 1024 * 1024
    ts = max(1, target_bytes // max(1, B * D * itemsize))
    if ts >= 8:
        ts = (ts // 8) * 8
    return min(S, ts)


# ----------------------------------------------------------------------------
# Wrapper
# ----------------------------------------------------------------------------
@functools.partial(jax.jit, static_argnames=("p", "training"))
def positional_encoding(x, pe, key, *, p: float = 0.1, training: bool = True):
    """x: (S, B, D); pe: (max_len, D); key: jax PRNG key for dropout."""
    assert 0.0 <= p < 1.0, "dropout p must be in [0, 1)"
    S, B, D = x.shape
    itemsize = jnp.dtype(x.dtype).itemsize

    # matches self.pe[:x.size(0), :] (shape (S, 1, D)), cast to compute dtype
    pe_s = pe[:S].reshape(S, 1, D).astype(x.dtype)

    ts = _choose_tile_s(S, B, D, itemsize)
    grid = (pl.cdiv(S, ts),)

    x_spec = pl.BlockSpec((ts, B, D), lambda s: (s, 0, 0))
    pe_spec = pl.BlockSpec((ts, 1, D), lambda s: (s, 0, 0))
    out_spec = pl.BlockSpec((ts, B, D), lambda s: (s, 0, 0))

    compiler_params = pltpu.CompilerParams(
        dimension_semantics=("parallel",),      # independent blocks -> megacore-shardable
        vmem_limit_bytes=48 * 1024 * 1024,      # fits v7x (64 MiB phys), raises v5e default
    )

    apply_dropout = training and p > 0.0
    if apply_dropout:
        # TODO(synk): on real TPU the on-chip PRNG (pltpu.prng_random_bits) would avoid
        # this extra HBM read stream, but it has no interpret-mode lowering, so the
        # random bits are generated here and streamed through the kernel instead.
        bits = jax.random.bits(key, (S, B, D), dtype=jnp.uint32)
        kernel = functools.partial(_pe_add_dropout_kernel, p=p)
        return pl.pallas_call(
            kernel,
            out_shape=jax.ShapeDtypeStruct((S, B, D), x.dtype),
            grid=grid,
            in_specs=[x_spec, pe_spec, x_spec],
            out_specs=out_spec,
            compiler_params=compiler_params,
        )(x, pe_s, bits)

    return pl.pallas_call(
        _pe_add_kernel,
        out_shape=jax.ShapeDtypeStruct((S, B, D), x.dtype),
        grid=grid,
        in_specs=[x_spec, pe_spec],
        out_specs=out_spec,
        compiler_params=compiler_params,
    )(x, pe_s)


if __name__ == "__main__":
    S, B, D = 8, 2, 128       # D = d_model kept lane-dense (multiple of 128)
    MAX_LEN = 64              # small stand-in for max_len=5000
    P = 0.1

    key = jax.random.PRNGKey(0)
    kx, kd = jax.random.split(key)
    x = jax.random.normal(kx, (S, B, D), dtype=jnp.float32)
    pe = make_positional_encoding(MAX_LEN, D)

    # Eval mode (dropout = identity): exact check of x + pe[:S] broadcast.
    y_eval = positional_encoding(x, pe, kd, p=P, training=False)
    jax.block_until_ready(y_eval)
    ref = x + pe[:S][:, None, :]
    assert jnp.allclose(y_eval, ref, atol=1e-6), "eval-mode mismatch"

    # Training mode: inverted dropout — each output is 0 or (x+pe)/(1-p).
    y_train = positional_encoding(x, pe, kd, p=P, training=True)
    jax.block_until_ready(y_train)
    assert bool(jnp.all(jnp.isfinite(y_train)))
    scaled_back = y_train * (1.0 - P)
    ok = jnp.isclose(scaled_back, ref, atol=1e-5, rtol=1e-5) | (y_train == 0.0)
    assert bool(jnp.all(ok)), "training-mode dropout mismatch"

    print("KERNEL_OK")
</pallas_src>

<mosaic_0001>
module attributes {stable_mosaic.version = 11 : i64} {
  func.func @_pe_add_kernel(%arg0: i32, %arg1: memref<8x2x128xf32, #tpu.memory_space<vmem>>, %arg2: memref<8x1x128xf32, #tpu.memory_space<vmem>>, %arg3: memref<8x2x128xf32, #tpu.memory_space<vmem>>) attributes {dimension_semantics = [#tpu.dimension_semantics<parallel>], iteration_bounds = array<i64: 1>, scalar_prefetch = 0 : i64, scratch_operands = 0 : i64, tpu.core_type = #tpu.core_type<tc>, window_params = [{transform_indices = @transform_0, window_bounds = array<i64: 8, 2, 128>}, {transform_indices = @transform_1, window_bounds = array<i64: 8, 1, 128>}, {transform_indices = @transform_2, window_bounds = array<i64: 8, 2, 128>}]} {
    %c0 = arith.constant 0 : index
    %c0_0 = arith.constant 0 : index
    %c0_1 = arith.constant 0 : index
    %0 = vector.load %arg1[%c0, %c0_0, %c0_1] : memref<8x2x128xf32, #tpu.memory_space<vmem>>, vector<8x2x128xf32>
    %c0_2 = arith.constant 0 : index
    %c0_3 = arith.constant 0 : index
    %c0_4 = arith.constant 0 : index
    %1 = vector.load %arg2[%c0_2, %c0_3, %c0_4] : memref<8x1x128xf32, #tpu.memory_space<vmem>>, vector<8x1x128xf32>
    %2 = vector.broadcast %1 : vector<8x1x128xf32> to vector<8x2x128xf32>
    %3 = arith.addf %0, %2 : vector<8x2x128xf32>
    %c0_5 = arith.constant 0 : index
    %c0_6 = arith.constant 0 : index
    %c0_7 = arith.constant 0 : index
    %4 = vector.load %arg3[%c0_5, %c0_6, %c0_7] : memref<8x2x128xf32, #tpu.memory_space<vmem>>, vector<8x2x128xf32>
    tpu.vector_store %arg3[%c0_5, %c0_6, %c0_7], %3 {strides = array<i32>} : memref<8x2x128xf32, #tpu.memory_space<vmem>>, vector<8x2x128xf32>,
    return
  }
  func.func @transform_0(%arg0: i32) -> (i32, i32, i32) {
    %c0_i32 = arith.constant 0 : i32
    %c0_i32_0 = arith.constant 0 : i32
    %c0_i32_1 = arith.constant 0 : i32
    return %arg0, %c0_i32, %c0_i32_0 : i32, i32, i32
  }
  func.func @transform_1(%arg0: i32) -> (i32, i32, i32) {
    %c0_i32 = arith.constant 0 : i32
    %c0_i32_0 = arith.constant 0 : i32
    %c0_i32_1 = arith.constant 0 : i32
    return %arg0, %c0_i32, %c0_i32_0 : i32, i32, i32
  }
  func.func @transform_2(%arg0: i32) -> (i32, i32, i32) {
    %c0_i32 = arith.constant 0 : i32
    %c0_i32_0 = arith.constant 0 : i32
    %c0_i32_1 = arith.constant 0 : i32
    return %arg0, %c0_i32, %c0_i32_0 : i32, i32, i32
  }
}

</mosaic_0001>

<llo_original>
// kernel: positional_encoding.1
$region0: #{positional_encoding.1}
  #allocation0 [shape = 'u32[]', space=smem, size = 0x4, offset = 0x4, fixed_abs, tag = 'smem constant byte address 0x4 - core index']
  #allocation1 [shape = 'u32[72,128]{1,0:T(1,128)}', space=vmem, size = 0x9000, scoped, tag = 'internal scratch']
  %s0 = inlined_call_operand.hbm [shape: f32[8,2,128], index: 0, kind: input, shape index: {}]
  %s1 = inlined_call_operand.vmem [shape: f32[8,1,128], index: 1, kind: input, shape index: {}]
  %s2 = inlined_call_operand.hbm [shape: f32[8,2,128], index: 2, kind: output, shape index: {}]
  %s3 = sld [smem:[#allocation0]]
  $region22: #{positional_encoding.1} parent=0
    _
  %s5 = ssub.s32 1, %s3
  %s6 = scalar_select 0, %s5, %s3
  $region1: #{positional_encoding.1} parent=0
    #allocation2 [shape = 'u8[8192]{0}', space=vmem, size = 0x2000, scoped, tag = 'input window, operand 0, single buffered']
    #allocation3 [shape = 's32[1]{0}', space=sflag, size = 0x4, scoped, tag = 'scoped memory for positional_encoding.1']
    #allocation4 [shape = 's32[1]{0}', space=sflag, size = 0x4, scoped, tag = 'scoped memory for positional_encoding.1']
    #allocation5 [shape = 'u8[8192]{0}', space=vmem, size = 0x2000, scoped, tag = 'output window, operand 0, single buffered']
    %7 = vsyncpa [#allocation3], 0
    %8 = vsyncpa [#allocation4], 0
    // Predicated region
    $region2: #{positional_encoding.1} parent=1 // pred_check
      _
    $region3: #{positional_encoding.1} parent=1 // pred_check_branch
      %10 = sbr.rel (0) target = $region5
    $region4: #{positional_encoding.1} parent=1 // pred_region
      %12 = vsyncadd [#allocation3], 0
      %s13 = sshll.u32 %s0, 4
      %s14 = int_to_ptr.hbm [resolvable:$true] %s13
      %s15 = sshll.u32 [#allocation2], 4
      %s16 = int_to_ptr.vmem [resolvable:$true] %s15
      %21 = dma.hbm_to_vmem [thread:$0]  %s14, 256, %s16, [#allocation3], 32, 32, 2
    $region5: #{positional_encoding.1} parent=1 // pred_fallthru
      _
    // Predicated region
    $region6: #{positional_encoding.1} parent=1 // pred_check
      _
    $region7: #{positional_encoding.1} parent=1 // pred_check_branch
      %23 = sbr.rel (0) target = $region9
    $region8: #{positional_encoding.1} parent=1 // pred_region
      _
    $region9: #{positional_encoding.1} parent=1 // pred_fallthru
      _
    // Predicated region
    $region10: #{positional_encoding.1} parent=1 // pred_check
      _
    $region11: #{positional_encoding.1} parent=1 // pred_check_branch
      %25 = sbr.rel (0) target = $region13
    $region12: #{positional_encoding.1} parent=1 // pred_region
      %27 = dma.done [#allocation3], 256
    $region13: #{positional_encoding.1} parent=1 // pred_fallthru
      _
    %v28 = vld [vmem:[#allocation2] sm:$0x3]
    %v29 = vld [vmem:[#allocation2 + $0x2] sm:$0x3]
    %v30 = vld [vmem:[#allocation2 + $0x4] sm:$0x3]
    %v31 = vld [vmem:[#allocation2 + $0x6] sm:$0x3]
    %v32 = vld [vmem:[#allocation2 + $0x8] sm:$0x3]
    %v33 = vld [vmem:[#allocation2 + $0xa] sm:$0x3]
    %v34 = vld [vmem:[#allocation2 + $0xc] sm:$0x3]
    %v35 = vld [vmem:[#allocation2 + $0xe] sm:$0x3]
    %v36 = vld [vmem:[%s1] sm:$0x1]
    %v37 = vld [vmem:[%s1 + $0x1] sm:$0x1]
    %v38 = vld [vmem:[%s1 + $0x2] sm:$0x1]
    %v39 = vld [vmem:[%s1 + $0x3] sm:$0x1]
    %v40 = vld [vmem:[%s1 + $0x4] sm:$0x1]
    %v41 = vld [vmem:[%s1 + $0x5] sm:$0x1]
    %v42 = vld [vmem:[%s1 + $0x6] sm:$0x1]
    %v43 = vld [vmem:[%s1 + $0x7] sm:$0x1]
    %v52 = vperm.slane %v36, 0
    %v53 = vperm.slane %v37, 0
    %v54 = vperm.slane %v38, 0
    %v55 = vperm.slane %v39, 0
    %v56 = vperm.slane %v40, 0
    %v57 = vperm.slane %v41, 0
    %v58 = vperm.slane %v42, 0
    %v59 = vperm.slane %v43, 0
    %v68 = vadd.f32 %v28, %v52
    %v69 = vadd.f32 %v29, %v53
    %v70 = vadd.f32 %v30, %v54
    %v71 = vadd.f32 %v31, %v55
    %v72 = vadd.f32 %v32, %v56
    %v73 = vadd.f32 %v33, %v57
    %v74 = vadd.f32 %v34, %v58
    %v75 = vadd.f32 %v35, %v59
    %76 = vst [vmem:[#allocation5] sm:$0x3] %v68
    %77 = vst [vmem:[#allocation5 + $0x2] sm:$0x3] %v69
    %78 = vst [vmem:[#allocation5 + $0x4] sm:$0x3] %v70
    %79 = vst [vmem:[#allocation5 + $0x6] sm:$0x3] %v71
    %80 = vst [vmem:[#allocation5 + $0x8] sm:$0x3] %v72
    %81 = vst [vmem:[#allocation5 + $0xa] sm:$0x3] %v73
    %82 = vst [vmem:[#allocation5 + $0xc] sm:$0x3] %v74
    %83 = vst [vmem:[#allocation5 + $0xe] sm:$0x3] %v75
    // Predicated region
    $region14: #{positional_encoding.1} parent=1 // pred_check
      _
    $region15: #{positional_encoding.1} parent=1 // pred_check_branch
      %85 = sbr.rel (0) target = $region17
    $region16: #{positional_encoding.1} parent=1 // pred_region
      %87 = vsyncadd [#allocation4], 0
      %s88 = sshll.u32 [#allocation5], 4
      %s89 = int_to_ptr.vmem [resolvable:$true] %s88
      %s90 = sshll.u32 %s2, 4
      %s91 = int_to_ptr.hbm [resolvable:$true] %s90
      %96 = dma.vmem_to_hbm [thread:$0]  %s89, 256, %s91, [#allocation4], 32, 32, 2
    $region17: #{positional_encoding.1} parent=1 // pred_fallthru
      _
    // Predicated region
    $region18: #{positional_encoding.1} parent=1 // pred_check
      _
    $region19: #{positional_encoding.1} parent=1 // pred_check_branch
      %98 = sbr.rel (0) target = $region21
    $region20: #{positional_encoding.1} parent=1 // pred_region
      %100 = dma.done [#allocation4], 256
    $region21: #{positional_encoding.1} parent=1 // pred_fallthru
      _
    %101 = vsyncpa [#allocation3], 1
    %102 = vsyncpa [#allocation4], 1

</llo_original>
